<compile_context>
chip_gen: v7x
topology: tpu7x:2x2x1
jax: 0.10.0
libtpu: 0.0.40
codegen_flags: <defaults>
</compile_context>

<pallas_src>
import functools

import jax
import jax.numpy as jnp
from jax.experimental import pallas as pl
from jax.experimental.pallas import tpu as pltpu

LOGZERO = -1.0e10   # matches self.logzero semantics (masked attention scores)


# ----------------------------------------------------------------------------
# tile-size helpers (conservative VMEM budget works on v5e/v6e/v7x defaults)
# ----------------------------------------------------------------------------
def _pick_time_tile(B, T, H, A, budget_bytes=8 << 20):
    divisors = [c for c in (1024, 512, 256, 128, 64, 32, 16, 8) if T % c == 0]
    if not divisors:
        return T                      # fall back to full extent (always legal)
    for c in divisors:                # largest aligned tile that fits budget
        if 2 * B * c * (H + A) * 4 <= budget_bytes:
            return c
    return divisors[-1]


def _pick_lane_tile(n, candidates=(1024, 512, 256, 128)):
    for c in candidates:
        if n % c == 0:
            return c
    return n                          # full extent (legal when < 128)


# ----------------------------------------------------------------------------
# Kernel A: per-utterance cached encoder projection (pre_compute_enc_h)
# ----------------------------------------------------------------------------
def _enc_proj_kernel(enc_ref, w_enc_ref, b_enc_ref, out_ref):
    B = enc_ref.shape[0]
    f32 = jnp.float32
    # static unroll over batch: rank-2 MXU matmuls, no (B*T, H) reshape relayout
    for b in range(B):
        out_ref[b] = jnp.tanh(
            jnp.dot(enc_ref[b], w_enc_ref[...], preferred_element_type=f32)
            + b_enc_ref[...])


def precompute_enc_proj(params, encoder_outputs, t_tile=None):
    B, T, H = encoder_outputs.shape
    A = params['w_enc'].shape[1]
    tT = t_tile if t_tile is not None else _pick_time_tile(B, T, H, A)
    assert T % tT == 0
    return pl.pallas_call(
        _enc_proj_kernel,
        out_shape=jax.ShapeDtypeStruct((B, T, A), jnp.float32),
        grid_spec=pltpu.PrefetchScalarGridSpec(
            num_scalar_prefetch=0,
            grid=(T // tT,),
            in_specs=[pl.BlockSpec((B, tT, H), lambda t: (0, t, 0)),
                      pl.BlockSpec((H, A), lambda t: (0, 0)),
                      pl.BlockSpec((1, A), lambda t: (0, 0))],
            out_specs=pl.BlockSpec((B, tT, A), lambda t: (0, t, 0))),
        compiler_params=pltpu.CompilerParams(
            dimension_semantics=("parallel",)),
    )(encoder_outputs, params['w_enc'], params['b_enc'])


# ----------------------------------------------------------------------------
# Kernel B: attention (online softmax over T tiles) + fused LSTM stack
# ----------------------------------------------------------------------------
def _attn_lstm_kernel(scaling,
                      emb_ref, seqlen_ref, enc_ref, encp_ref,
                      w_dec_ref, b_dec_ref,
                      h_prev_ref, c_prev_ref,
                      w_l0_ref, b0_ref, w_r_ref, b_r_ref,
                      attw_ref, h_new_ref, c_new_ref,
                      m_scr, l_scr, ctx_scr, dec_scr, x0_scr, xl_scr):
    t = pl.program_id(0)
    n_t = pl.num_programs(0)
    B, tT, H = enc_ref.shape
    A = encp_ref.shape[2]
    L = h_prev_ref.shape[0]
    E = h_prev_ref.shape[2]
    f32 = jnp.float32

    # ---- init accumulators + decoder-side projection (query) at t == 0 ------
    @pl.when(t == 0)
    def _init():
        m_scr[...] = jnp.full(m_scr.shape, -1.0e30, dtype=f32)
        l_scr[...] = jnp.zeros(l_scr.shape, f32)
        ctx_scr[...] = jnp.zeros(ctx_scr.shape, f32)
        dec_scr[...] = jnp.tanh(
            jnp.dot(h_prev_ref[0], w_dec_ref[...], preferred_element_type=f32)
            + b_dec_ref[...])

    # ---- attention scores for this T tile -----------------------------------
    encp = encp_ref[...]                                           # (B, tT, A)
    e = jnp.sum(encp * dec_scr[...][:, None, :], axis=2)           # (B, tT)

    # in-kernel seq-length mask (no (B,T) mask streamed from HBM)
    col = jax.lax.broadcasted_iota(jnp.int32, (B, tT), 1) + t * tT
    valid = col < seqlen_ref[...]                                  # (B,1) bcast
    e = jnp.where(valid, e, LOGZERO) * scaling

    # store raw masked scores into the (VMEM-resident) att_w output block;
    # normalized in place at the last tile.
    start = pl.multiple_of(t * tT, tT)
    attw_ref[:, pl.ds(start, tT)] = e

    # ---- online softmax / context accumulation ------------------------------
    e_max = jnp.max(e, axis=1, keepdims=True)                      # (B, 1)
    m_new = jnp.maximum(m_scr[...], e_max)
    alpha = jnp.exp(m_scr[...] - m_new)
    p = jnp.exp(e - m_new)                                         # (B, tT)
    l_scr[...] = alpha * l_scr[...] + jnp.sum(p, axis=1, keepdims=True)
    ctx_scr[...] = (alpha * ctx_scr[...]
                    + jnp.sum(p[:, :, None] * enc_ref[...], axis=1))  # (B, H)
    m_scr[...] = m_new

    # ---- finalize: normalize, run LSTM stack, write states -------------------
    @pl.when(t == n_t - 1)
    def _finalize():
        inv_l = 1.0 / l_scr[...]                                   # (B, 1)
        context = ctx_scr[...] * inv_l                             # (B, H)
        attw_ref[...] = jnp.exp(attw_ref[...] - m_scr[...]) * inv_l

        def gates_to_hc(gates, c_prev):
            i = jax.nn.sigmoid(gates[:, 0 * E:1 * E])
            f = jax.nn.sigmoid(gates[:, 1 * E:2 * E])
            g = jnp.tanh(gates[:, 2 * E:3 * E])
            o = jax.nn.sigmoid(gates[:, 3 * E:4 * E])
            c_n = f * c_prev + i * g
            h_n = o * jnp.tanh(c_n)
            return h_n, c_n

        # layer 0: one fused matmul on [emb | context | h_prev0]
        x0_scr[:, 0:E] = emb_ref[...]
        x0_scr[:, E:E + H] = context
        x0_scr[:, E + H:E + H + E] = h_prev_ref[0]
        gates0 = (jnp.dot(x0_scr[...], w_l0_ref[...],
                          preferred_element_type=f32) + b0_ref[...])
        h_l, c_l = gates_to_hc(gates0, c_prev_ref[0])
        h_new_ref[0] = h_l
        c_new_ref[0] = c_l

        # layers >= 1: one fused matmul on [h_{l-1} | h_prev[l]]
        for l in range(1, L):
            xl_scr[:, 0:E] = h_l
            xl_scr[:, E:2 * E] = h_prev_ref[l]
            gates = (jnp.dot(xl_scr[...], w_r_ref[l - 1],
                             preferred_element_type=f32)
                     + b_r_ref[l - 1:l, :])
            h_l, c_l = gates_to_hc(gates, c_prev_ref[l])
            h_new_ref[l] = h_l
            c_new_ref[l] = c_l


# ----------------------------------------------------------------------------
# Kernel C: output projection, tiled ("parallel") over the vocab dim
# ----------------------------------------------------------------------------
def _out_proj_kernel(h_ref, w_ref, b_ref, o_ref):
    o_ref[...] = (jnp.dot(h_ref[...], w_ref[...],
                          preferred_element_type=jnp.float32) + b_ref[...])


# ----------------------------------------------------------------------------
# Parameters
# ----------------------------------------------------------------------------
def init_params(key, hidden_size, emb_size, output_size, att_size, n_layers):
    ks = jax.random.split(key, 13)

    def nrm(k, shape, scale=0.1):
        return scale * jax.random.normal(k, shape, dtype=jnp.float32)

    p = {}
    p['embedding'] = nrm(ks[0], (output_size, emb_size))            # nn.Embedding
    p['w_enc'] = nrm(ks[1], (hidden_size, att_size))                # att: mlp_enc
    p['b_enc'] = nrm(ks[2], (1, att_size))
    p['w_dec'] = nrm(ks[3], (emb_size, att_size))                   # att: mlp_dec
    p['b_dec'] = nrm(ks[4], (1, att_size))
    # LSTMCell weights pre-transposed: (input_dim, 4*emb); bias = b_ih + b_hh
    p['w_ih0'] = nrm(ks[5], (emb_size + hidden_size, 4 * emb_size))
    p['w_hh0'] = nrm(ks[6], (emb_size, 4 * emb_size))
    p['b0'] = nrm(ks[7], (1, 4 * emb_size))
    p['w_ih_r'] = nrm(ks[8], (n_layers - 1, emb_size, 4 * emb_size))
    p['w_hh_r'] = nrm(ks[9], (n_layers - 1, emb_size, 4 * emb_size))
    p['b_r'] = nrm(ks[10], (n_layers - 1, 4 * emb_size))
    p['w_out'] = nrm(ks[11], (emb_size, output_size))               # nn.Linear out
    p['b_out'] = nrm(ks[12], (1, output_size))
    return p


# ----------------------------------------------------------------------------
# Forward wrapper (one decode step)
# ----------------------------------------------------------------------------
def decoder_forward(params, token_ids, hidden_list, cell_list,
                    encoder_outputs, enc_proj, seqlen,
                    scaling=2.0, decoding_index=0, t_tile=None, o_tile=None):
    B, T, H = encoder_outputs.shape
    E = params['w_hh0'].shape[0]
    A = params['w_dec'].shape[1]
    L = len(hidden_list)
    O = params['w_out'].shape[1]

    # glue: embedding lookup + state stacking (cheap, stays in JAX)
    # TODO(synk): embedding gather stays a JAX `take`; a DMA-gather kernel is
    #             only worthwhile once multiple decode steps are fused.
    emb = jnp.take(params['embedding'], token_ids, axis=0)          # (B, E)
    seqlen2d = seqlen.astype(jnp.int32).reshape(B, 1)
    h_prev = jnp.stack(hidden_list, axis=0)                         # (L, B, E)
    c_prev = jnp.stack(cell_list, axis=0)

    # fused LSTM weights: one matmul per layer inside the kernel
    w_l0 = jnp.concatenate([params['w_ih0'], params['w_hh0']], axis=0)   # (E+H+E, 4E)
    b0 = params['b0']
    if L > 1:
        w_r = jnp.concatenate([params['w_ih_r'], params['w_hh_r']], axis=1)  # (L-1, 2E, 4E)
        b_r = params['b_r']
    else:
        w_r = jnp.zeros((1, 2 * E, 4 * E), jnp.float32)    # unused dummy
        b_r = jnp.zeros((1, 4 * E), jnp.float32)
    Lr = w_r.shape[0]

    tT = t_tile if t_tile is not None else _pick_time_tile(B, T, H, A)
    assert T % tT == 0, "t_tile must divide T"

    kernel_b = functools.partial(_attn_lstm_kernel, float(scaling))
    att_w, h_new, c_new = pl.pallas_call(
        kernel_b,
        out_shape=(
            jax.ShapeDtypeStruct((B, T), jnp.float32),
            jax.ShapeDtypeStruct((L, B, E), jnp.float32),
            jax.ShapeDtypeStruct((L, B, E), jnp.float32),
        ),
        grid_spec=pltpu.PrefetchScalarGridSpec(
            num_scalar_prefetch=0,
            grid=(T // tT,),
            in_specs=[
                pl.BlockSpec((B, E), lambda t: (0, 0)),             # emb
                pl.BlockSpec((B, 1), lambda t: (0, 0)),             # seqlen
                pl.BlockSpec((B, tT, H), lambda t: (0, t, 0)),      # enc tile
                pl.BlockSpec((B, tT, A), lambda t: (0, t, 0)),      # enc_proj tile
                pl.BlockSpec((E, A), lambda t: (0, 0)),             # w_dec
                pl.BlockSpec((1, A), lambda t: (0, 0)),             # b_dec
                pl.BlockSpec((L, B, E), lambda t: (0, 0, 0)),       # h_prev
                pl.BlockSpec((L, B, E), lambda t: (0, 0, 0)),       # c_prev
                pl.BlockSpec((2 * E + H, 4 * E), lambda t: (0, 0)),  # w_l0 fused
                pl.BlockSpec((1, 4 * E), lambda t: (0, 0)),         # b0
                pl.BlockSpec((Lr, 2 * E, 4 * E), lambda t: (0, 0, 0)),  # w_r fused
                pl.BlockSpec((Lr, 4 * E), lambda t: (0, 0)),        # b_r
            ],
            out_specs=(
                pl.BlockSpec((B, T), lambda t: (0, 0)),             # att_w (resident)
                pl.BlockSpec((L, B, E), lambda t: (0, 0, 0)),       # h_new
                pl.BlockSpec((L, B, E), lambda t: (0, 0, 0)),       # c_new
            ),
            scratch_shapes=[
                pltpu.VMEM((B, 1), jnp.float32),          # running max
                pltpu.VMEM((B, 1), jnp.float32),          # running denom
                pltpu.VMEM((B, H), jnp.float32),          # context accumulator
                pltpu.VMEM((B, A), jnp.float32),          # dec_proj (query)
                pltpu.VMEM((B, 2 * E + H), jnp.float32),  # fused layer-0 input
                pltpu.VMEM((B, 2 * E), jnp.float32),      # fused layer-l input
            ]),
        input_output_aliases={6: 1, 7: 2},   # h_prev->h_new, c_prev->c_new
        compiler_params=pltpu.CompilerParams(
            dimension_semantics=("arbitrary",)),
    )(emb, seqlen2d, encoder_outputs, enc_proj,
      params['w_dec'], params['b_dec'], h_prev, c_prev,
      w_l0, b0, w_r, b_r)

    # output projection, vocab-tiled
    h_last = h_new[L - 1]
    tO = o_tile if o_tile is not None else _pick_lane_tile(O)
    assert O % tO == 0, "o_tile must divide output_size"
    logits = pl.pallas_call(
        _out_proj_kernel,
        out_shape=jax.ShapeDtypeStruct((B, O), jnp.float32),
        grid_spec=pltpu.PrefetchScalarGridSpec(
            num_scalar_prefetch=0,
            grid=(O // tO,),
            in_specs=[pl.BlockSpec((B, E), lambda o: (0, 0)),
                      pl.BlockSpec((E, tO), lambda o: (0, o)),
                      pl.BlockSpec((1, tO), lambda o: (0, o))],
            out_specs=pl.BlockSpec((B, tO), lambda o: (0, o))),
        compiler_params=pltpu.CompilerParams(
            dimension_semantics=("parallel",)),
    )(h_last, params['w_out'], params['b_out'])

    new_hidden_list = [h_new[l] for l in range(L)]
    new_cell_list = [c_new[l] for l in range(L)]
    attention = att_w[decoding_index]
    att_prev = att_w
    return logits, new_hidden_list, new_cell_list, attention, att_prev


# ----------------------------------------------------------------------------
# Pure-JAX reference for numerical validation (same math, no Pallas)
# ----------------------------------------------------------------------------
def reference_forward(params, token_ids, hidden_list, cell_list,
                      encoder_outputs, seqlen, scaling=2.0, decoding_index=0):
    B, T, H = encoder_outputs.shape
    E = params['w_hh0'].shape[0]
    emb = params['embedding'][token_ids]
    mask = jnp.arange(T)[None, :] < seqlen[:, None]

    enc_proj = jnp.tanh(encoder_outputs @ params['w_enc'] + params['b_enc'])
    dec_proj = jnp.tanh(hidden_list[0] @ params['w_dec'] + params['b_dec'])
    e = jnp.sum(enc_proj * dec_proj[:, None, :], axis=2)
    e = jnp.where(mask, e, LOGZERO) * scaling
    att_w = jax.nn.softmax(e, axis=1)
    context = jnp.sum(att_w[:, :, None] * encoder_outputs, axis=1)
    x = jnp.concatenate([emb, context], axis=1)

    def cell(x, h, c, w_ih, w_hh, b):
        gates = x @ w_ih + h @ w_hh + b
        i = jax.nn.sigmoid(gates[:, :E])
        f = jax.nn.sigmoid(gates[:, E:2 * E])
        g = jnp.tanh(gates[:, 2 * E:3 * E])
        o = jax.nn.sigmoid(gates[:, 3 * E:])
        c_n = f * c + i * g
        return o * jnp.tanh(c_n), c_n

    h_l, c_l = cell(x, hidden_list[0], cell_list[0],
                    params['w_ih0'], params['w_hh0'], params['b0'])
    hs, cs = [h_l], [c_l]
    for l in range(1, len(hidden_list)):
        h_l, c_l = cell(h_l, hidden_list[l], cell_list[l],
                        params['w_ih_r'][l - 1], params['w_hh_r'][l - 1],
                        params['b_r'][l - 1])
        hs.append(h_l)
        cs.append(c_l)
    logits = h_l @ params['w_out'] + params['b_out']
    return logits, hs, cs, att_w[decoding_index], att_w


if __name__ == "__main__":
    key = jax.random.PRNGKey(0)
    B, T = 2, 16
    hidden_size, emb_size, output_size, att_size, n_layers = 32, 16, 256, 16, 2

    kp, ke, kh, kc, kt = jax.random.split(key, 5)
    params = init_params(kp, hidden_size, emb_size, output_size, att_size,
                         n_layers)

    encoder_outputs = jax.random.normal(ke, (B, T, hidden_size),
                                        dtype=jnp.float32)
    seqlen = jnp.array([T, T - 5], dtype=jnp.int32)
    token_ids = jax.random.randint(kt, (B,), 0, output_size)
    hkeys = jax.random.split(kh, n_layers)
    ckeys = jax.random.split(kc, n_layers)
    hidden_list = [0.1 * jax.random.normal(hkeys[l], (B, emb_size),
                                           dtype=jnp.float32)
                   for l in range(n_layers)]
    cell_list = [0.1 * jax.random.normal(ckeys[l], (B, emb_size),
                                         dtype=jnp.float32)
                 for l in range(n_layers)]

    precompute = jax.jit(precompute_enc_proj, static_argnames=("t_tile",))
    fwd = jax.jit(decoder_forward,
                  static_argnames=("scaling", "decoding_index",
                                   "t_tile", "o_tile"))

    # per-utterance cached encoder projection (ESPnet pre_compute_enc_h)
    enc_proj = precompute(params, encoder_outputs, t_tile=8)

    # t_tile=8 -> 2 T-tiles (exercises online-softmax accumulation);
    # o_tile=128 -> 2 vocab tiles (exercises the parallel output grid).
    out = fwd(params, token_ids, hidden_list, cell_list, encoder_outputs,
              enc_proj, seqlen, scaling=2.0, decoding_index=0,
              t_tile=8, o_tile=128)
    out = jax.block_until_ready(out)
    logits, h_new, c_new, attention, att_prev = out

    r_logits, r_h, r_c, r_att, r_att_prev = reference_forward(
        params, token_ids, hidden_list, cell_list, encoder_outputs, seqlen)

    assert jnp.allclose(logits, r_logits, atol=1e-4, rtol=1e-4)
    assert jnp.allclose(attention, r_att, atol=1e-4, rtol=1e-4)
    assert jnp.allclose(att_prev, r_att_prev, atol=1e-4, rtol=1e-4)
    for l in range(n_layers):
        assert jnp.allclose(h_new[l], r_h[l], atol=1e-4, rtol=1e-4)
        assert jnp.allclose(c_new[l], r_c[l], atol=1e-4, rtol=1e-4)

    print("KERNEL_OK")
</pallas_src>

<mosaic_0001>
module attributes {stable_mosaic.version = 11 : i64} {
  func.func @_enc_proj_kernel(%arg0: i32, %arg1: memref<2x8x32xf32, #tpu.memory_space<vmem>>, %arg2: memref<32x16xf32, #tpu.memory_space<vmem>>, %arg3: memref<1x16xf32, #tpu.memory_space<vmem>>, %arg4: memref<2x8x16xf32, #tpu.memory_space<vmem>>) attributes {dimension_semantics = [#tpu.dimension_semantics<parallel>], iteration_bounds = array<i64: 2>, scalar_prefetch = 0 : i64, scratch_operands = 0 : i64, tpu.core_type = #tpu.core_type<tc>, window_params = [{transform_indices = @transform_0, window_bounds = array<i64: 2, 8, 32>}, {pipeline_mode = #tpu.pipeline_mode<synchronous>, transform_indices = @transform_1, window_bounds = array<i64: 32, 16>}, {pipeline_mode = #tpu.pipeline_mode<synchronous>, transform_indices = @transform_2, window_bounds = array<i64: 1, 16>}, {transform_indices = @transform_3, window_bounds = array<i64: 2, 8, 16>}]} {
    %c0 = arith.constant 0 : index
    %c0_0 = arith.constant 0 : index
    %c0_1 = arith.constant 0 : index
    %0 = vector.load %arg1[%c0, %c0_0, %c0_1] : memref<2x8x32xf32, #tpu.memory_space<vmem>>, vector<1x8x32xf32>
    %1 = vector.shape_cast %0 : vector<1x8x32xf32> to vector<8x32xf32>
    %c0_2 = arith.constant 0 : index
    %c0_3 = arith.constant 0 : index
    %2 = vector.load %arg2[%c0_2, %c0_3] : memref<32x16xf32, #tpu.memory_space<vmem>>, vector<32x16xf32>
    %cst = arith.constant dense<0.000000e+00> : vector<8x16xf32>
    %3 = tpu.matmul %1, %2, %cst {dimension_numbers = #tpu.dot_dimension_numbers<[1], [0], [0], [1], [0, 0, 1, 1], [], []>} : vector<8x32xf32>, vector<32x16xf32>, vector<8x16xf32> -> vector<8x16xf32>
    %c0_4 = arith.constant 0 : index
    %c0_5 = arith.constant 0 : index
    %4 = vector.load %arg3[%c0_4, %c0_5] : memref<1x16xf32, #tpu.memory_space<vmem>>, vector<1x16xf32>
    %5 = vector.broadcast %4 : vector<1x16xf32> to vector<8x16xf32>
    %6 = arith.addf %3, %5 : vector<8x16xf32>
    %7 = math.tanh %6 : vector<8x16xf32>
    %c0_6 = arith.constant 0 : index
    %c0_7 = arith.constant 0 : index
    %c0_8 = arith.constant 0 : index
    %8 = vector.load %arg4[%c0_6, %c0_7, %c0_8] : memref<2x8x16xf32, #tpu.memory_space<vmem>>, vector<1x8x16xf32>
    %9 = vector.shape_cast %8 : vector<1x8x16xf32> to vector<8x16xf32>
    %10 = vector.shape_cast %7 : vector<8x16xf32> to vector<1x8x16xf32>
    tpu.vector_store %arg4[%c0_6, %c0_7, %c0_8], %10 {strides = array<i32>} : memref<2x8x16xf32, #tpu.memory_space<vmem>>, vector<1x8x16xf32>,
    %c1 = arith.constant 1 : index
    %c0_9 = arith.constant 0 : index
    %c0_10 = arith.constant 0 : index
    %11 = vector.load %arg1[%c1, %c0_9, %c0_10] : memref<2x8x32xf32, #tpu.memory_space<vmem>>, vector<1x8x32xf32>
    %12 = vector.shape_cast %11 : vector<1x8x32xf32> to vector<8x32xf32>
    %c0_11 = arith.constant 0 : index
    %c0_12 = arith.constant 0 : index
    %13 = vector.load %arg2[%c0_11, %c0_12] : memref<32x16xf32, #tpu.memory_space<vmem>>, vector<32x16xf32>
    %cst_13 = arith.constant dense<0.000000e+00> : vector<8x16xf32>
    %14 = tpu.matmul %12, %13, %cst_13 {dimension_numbers = #tpu.dot_dimension_numbers<[1], [0], [0], [1], [0, 0, 1, 1], [], []>} : vector<8x32xf32>, vector<32x16xf32>, vector<8x16xf32> -> vector<8x16xf32>
    %c0_14 = arith.constant 0 : index
    %c0_15 = arith.constant 0 : index
    %15 = vector.load %arg3[%c0_14, %c0_15] : memref<1x16xf32, #tpu.memory_space<vmem>>, vector<1x16xf32>
    %16 = vector.broadcast %15 : vector<1x16xf32> to vector<8x16xf32>
    %17 = arith.addf %14, %16 : vector<8x16xf32>
    %18 = math.tanh %17 : vector<8x16xf32>
    %c1_16 = arith.constant 1 : index
    %c0_17 = arith.constant 0 : index
    %c0_18 = arith.constant 0 : index
    %19 = vector.load %arg4[%c1_16, %c0_17, %c0_18] : memref<2x8x16xf32, #tpu.memory_space<vmem>>, vector<1x8x16xf32>
    %20 = vector.shape_cast %19 : vector<1x8x16xf32> to vector<8x16xf32>
    %21 = vector.shape_cast %18 : vector<8x16xf32> to vector<1x8x16xf32>
    tpu.vector_store %arg4[%c1_16, %c0_17, %c0_18], %21 {strides = array<i32>} : memref<2x8x16xf32, #tpu.memory_space<vmem>>, vector<1x8x16xf32>,
    return
  }
  func.func @transform_0(%arg0: i32) -> (i32, i32, i32) {
    %c0_i32 = arith.constant 0 : i32
    %c0_i32_0 = arith.constant 0 : i32
    %c0_i32_1 = arith.constant 0 : i32
    return %c0_i32, %arg0, %c0_i32_0 : i32, i32, i32
  }
  func.func @transform_1(%arg0: i32) -> (i32, i32) {
    %c0_i32 = arith.constant 0 : i32
    %c0_i32_0 = arith.constant 0 : i32
    %c0_i32_1 = arith.constant 0 : i32
    return %c0_i32, %c0_i32_0 : i32, i32
  }
  func.func @transform_2(%arg0: i32) -> (i32, i32) {
    %c0_i32 = arith.constant 0 : i32
    %c0_i32_0 = arith.constant 0 : i32
    %c0_i32_1 = arith.constant 0 : i32
    return %c0_i32, %c0_i32_0 : i32, i32
  }
  func.func @transform_3(%arg0: i32) -> (i32, i32, i32) {
    %c0_i32 = arith.constant 0 : i32
    %c0_i32_0 = arith.constant 0 : i32
    %c0_i32_1 = arith.constant 0 : i32
    return %c0_i32, %arg0, %c0_i32_0 : i32, i32, i32
  }
}

</mosaic_0001>

<llo_original>
// kernel: precompute_enc_proj.1
$region0: #{precompute_enc_proj.1}
  #allocation0 [shape = 'u32[]', space=smem, size = 0x4, offset = 0x4, fixed_abs, tag = 'smem constant byte address 0x4 - core index']
  #allocation1 [shape = 'u32[144,128]{1,0:T(1,128)}', space=vmem, size = 0x12000, scoped, tag = 'internal scratch']
  %s0 = inlined_call_operand.vmem [shape: f32[2,16,32], index: 0, kind: input, shape index: {}]
  %s1 = inlined_call_operand.vmem [shape: f32[32,16], index: 1, kind: input, shape index: {}]
  %s2 = inlined_call_operand.vmem [shape: f32[1,16], index: 2, kind: input, shape index: {}]
  %s3 = inlined_call_operand.hbm [shape: f32[2,16,16], index: 3, kind: output, shape index: {}]
  %s4 = sld [smem:[#allocation0]]
  $region83: #{precompute_enc_proj.1} parent=0
    _
  %s6 = ssub.s32 1, %s4
  %s7 = scalar_select 0, %s6, %s4
  $region1: #{precompute_enc_proj.1} parent=0
    #allocation2 [shape = 'u8[16384]{0}', space=vmem, size = 0x4000, scoped, tag = 'input window, operand 0']
    #allocation3 [shape = 'u8[16384]{0}', space=vmem, size = 0x4000, scoped, tag = 'output window, operand 0']
    #allocation4 [shape = 's32[2]{0}', space=sflag, size = 0x8, scoped, tag = 'scoped memory for precompute_enc_proj.1']
    %8 = vsyncpa [#allocation4], 0
    %s9 = scalar_lea.sflag [#allocation4], 1
    %10 = vsyncpa %s9, 0
    loop: start=0, step=1, limit=4
    $region2: #{precompute_enc_proj.1} parent=1 // loop_pre_header
      _
    $region3: #{precompute_enc_proj.1} parent=1 // loop_header
      %s12 = sphi 0, %s16
      %p13 = scmp.ge.s32.totalorder %s12, 4
      %s22 = sphi 0, %s24
      %s25 = sphi 0, %s22
      %s26 = sphi 0, %s25
      %s42 = sphi 0, %s26
      %s46 = sphi 0, %s46
      %s48 = sphi 0, %s46
      %s49 = sphi 0, %s48
      %s63 = sphi 0, %s49
      %s67 = sphi 0, %s67
      %s69 = sphi 0, %s67
      %s70 = sphi 0, %s69
      %s84 = sphi 0, %s70
      %s90 = sphi 0, %s92
      %s93 = sphi 0, %s90
      %s94 = sphi 0, %s93
      %s110 = sphi 0, %s94
    $region4: #{precompute_enc_proj.1} parent=1 // loop_header_branch
      %15 = sbr.rel (%p13) target = $region8
    $region5: #{precompute_enc_proj.1} parent=1 // loop_body
      %s17 = ssub.s32 %s12, 1
      %s18 = ssub.s32 %s12, 2
      %s19 = sadd.s32 %s12, 1
      %s20 = ssub.s32 %s12, %s19
      %p21 = scmp.eq.s32.totalorder %s20, 0
      %s23 = sadd.s32 %s22, 1
      %s24 = scalar_select %p21, %s22, %s23
      %p27 = pneg %p21
      %p28 = scmp.eq.s32.totalorder %s12, 1
      %p29 = por %p27, %p28
      %p30 = scmp.ne.s32.totalorder %s22, %s25
      %p31 = scmp.eq.s32.totalorder %s12, 0
      %p32 = por %p30, %p31
      %p33 = scmp.ne.s32.totalorder %s22, %s25
      %p34 = scmp.eq.s32.totalorder %s17, 1
      %p35 = por %p33, %p34
      %p36 = scmp.ne.s32.totalorder %s25, %s26
      %p37 = scmp.eq.s32.totalorder %s17, 0
      %p38 = por %p36, %p37
      %p39 = scmp.ne.s32.totalorder %s25, %s26
      %p40 = scmp.eq.s32.totalorder %s18, 1
      %p41 = por %p39, %p40
      %p43 = scmp.ne.s32.totalorder %s26, %s42
      %p44 = scmp.eq.s32.totalorder %s18, 0
      %p45 = por %p43, %p44
      %s47 = sadd.s32 %s46, 1
      %p50 = scmp.eq.s32.totalorder %s12, 1
      %p51 = scmp.ne.s32.totalorder %s46, %s48
      %p52 = scmp.eq.s32.totalorder %s12, 0
      %p53 = por %p51, %p52
      %p54 = scmp.ne.s32.totalorder %s46, %s48
      %p55 = scmp.eq.s32.totalorder %s17, 1
      %p56 = por %p54, %p55
      %p57 = scmp.ne.s32.totalorder %s48, %s49
      %p58 = scmp.eq.s32.totalorder %s17, 0
      %p59 = por %p57, %p58
      %p60 = scmp.ne.s32.totalorder %s48, %s49
      %p61 = scmp.eq.s32.totalorder %s18, 1
      %p62 = por %p60, %p61
      %p64 = scmp.ne.s32.totalorder %s49, %s63
      %p65 = scmp.eq.s32.totalorder %s18, 0
      %p66 = por %p64, %p65
      %s68 = sadd.s32 %s67, 1
      %p71 = scmp.eq.s32.totalorder %s12, 1
      %p72 = scmp.ne.s32.totalorder %s67, %s69
      %p73 = scmp.eq.s32.totalorder %s12, 0
      %p74 = por %p72, %p73
      %p75 = scmp.ne.s32.totalorder %s67, %s69
      %p76 = scmp.eq.s32.totalorder %s17, 1
      %p77 = por %p75, %p76
      %p78 = scmp.ne.s32.totalorder %s69, %s70
      %p79 = scmp.eq.s32.totalorder %s17, 0
      %p80 = por %p78, %p79
      %p81 = scmp.ne.s32.totalorder %s69, %s70
      %p82 = scmp.eq.s32.totalorder %s18, 1
      %p83 = por %p81, %p82
      %p85 = scmp.ne.s32.totalorder %s70, %s84
      %p86 = scmp.eq.s32.totalorder %s18, 0
      %p87 = por %p85, %p86
      %s88 = ssub.s32 %s12, %s19
      %p89 = scmp.eq.s32.totalorder %s88, 0
      %s91 = sadd.s32 %s90, 1
      %s92 = scalar_select %p89, %s90, %s91
      %p95 = pneg %p89
      %p96 = scmp.eq.s32.totalorder %s12, 1
      %p97 = por %p95, %p96
      %p98 = scmp.ne.s32.totalorder %s90, %s93
      %p99 = scmp.eq.s32.totalorder %s12, 0
      %p100 = por %p98, %p99
      %p101 = scmp.ne.s32.totalorder %s90, %s93
      %p102 = scmp.eq.s32.totalorder %s17, 1
      %p103 = por %p101, %p102
      %p104 = scmp.ne.s32.totalorder %s93, %s94
      %p105 = scmp.eq.s32.totalorder %s17, 0
      %p106 = por %p104, %p105
      %p107 = scmp.ne.s32.totalorder %s93, %s94
      %p108 = scmp.eq.s32.totalorder %s18, 1
      %p109 = por %p107, %p108
      %p111 = scmp.ne.s32.totalorder %s94, %s110
      %p112 = scmp.eq.s32.totalorder %s18, 0
      %p113 = por %p111, %p112
      %p114 = scmp.le.s32.totalorder 1, %s12
      %p115 = scmp.lt.s32.totalorder %s12, 3
      %p116 = pnand %p114, %p115
      %p117 = pneg %p116
      // Predicated region
      $region9: #{precompute_enc_proj.1} parent=5 // pred_check
        _
      $region10: #{precompute_enc_proj.1} parent=5 // pred_check_branch
        %119 = sbr.rel (%p116) target = $region12
      $region11: #{precompute_enc_proj.1} parent=5 // pred_region
        %s120 = ssub.s32 %s12, 1
        // Predicated region
        $region13: #{precompute_enc_proj.1} parent=11 // pred_check
          %p121 = pneg %p59
        $region14: #{precompute_enc_proj.1} parent=11 // pred_check_branch
          %123 = sbr.rel (%p121) target = $region16
        $region15: #{precompute_enc_proj.1} parent=11 // pred_region
          _
        $region16: #{precompute_enc_proj.1} parent=11 // pred_fallthru
          _
        // Predicated region
        $region17: #{precompute_enc_proj.1} parent=11 // pred_check
          %p124 = pneg %p80
        $region18: #{precompute_enc_proj.1} parent=11 // pred_check_branch
          %126 = sbr.rel (%p124) target = $region20
        $region19: #{precompute_enc_proj.1} parent=11 // pred_region
          _
        $region20: #{precompute_enc_proj.1} parent=11 // pred_fallthru
          _
      $region12: #{precompute_enc_proj.1} parent=5 // pred_fallthru
        _
      %p127 = scmp.lt.s32.totalorder %s12, 2
      // Predicated region
      $region21: #{precompute_enc_proj.1} parent=5 // pred_check
        %p128 = pneg %p127
      $region22: #{precompute_enc_proj.1} parent=5 // pred_check_branch
        %130 = sbr.rel (%p128) target = $region24
      $region23: #{precompute_enc_proj.1} parent=5 // pred_region
        // Predicated region
        $region25: #{precompute_enc_proj.1} parent=23 // pred_check
          %p131 = pneg %p32
        $region26: #{precompute_enc_proj.1} parent=23 // pred_check_branch
          %133 = sbr.rel (%p131) target = $region28
        $region27: #{precompute_enc_proj.1} parent=23 // pred_region
          %s134 = sand.u32 %s22, 1
          %s135 = sand.u32 %s22, 1
          %s136 = smul.addr %s135, 16
          %s137 = scalar_lea.vmem [#allocation2], %s136
          %s138 = smul.addr %s12, 8
          %s139 = scalar_lea.vmem %s0, %s138
          // Predicated region
          $region29: #{precompute_enc_proj.1} parent=27 // pred_check
            _
          $region30: #{precompute_enc_proj.1} parent=27 // pred_check_branch
            %141 = sbr.rel (0) target = $region32
          $region31: #{precompute_enc_proj.1} parent=27 // pred_region
            // Predicated region
            $region33: #{precompute_enc_proj.1} parent=31 // pred_check
              _
            $region34: #{precompute_enc_proj.1} parent=31 // pred_check_branch
              %143 = sbr.rel (0) target = $region36
            $region35: #{precompute_enc_proj.1} parent=31 // pred_region
              // Predicated region
              $region48: #{precompute_enc_proj.1} parent=35 // pred_check
                _
              $region49: #{precompute_enc_proj.1} parent=35 // pred_check_branch
                %160 = sbr.rel (0) target = $region51
              $region50: #{precompute_enc_proj.1} parent=35 // pred_region
                loop: start=0, step=1, limit=1
                $region52: #{precompute_enc_proj.1} parent=50 // loop_pre_header
                  _
                $region53: #{precompute_enc_proj.1} parent=50 // loop_header
                  %s162 = sphi 0, %s166
                  %p163 = scmp.ge.s32.totalorder %s162, 1
                  %s167 = sphi %s139, %s139
                  %s168 = sphi %s137, %s137
                $region54: #{precompute_enc_proj.1} parent=50 // loop_header_branch
                  %165 = sbr.rel (%p163) target = $region58
                $region55: #{precompute_enc_proj.1} parent=50 // loop_body
                  %v169 = vld [vmem:[%s167] sm:$0xff]
                  %170 = vst [vmem:[%s168] sm:$0xff] %v169
                  %v171 = vld [vmem:[%s167 + $0x10] sm:$0xff]
                  %172 = vst [vmem:[%s168 + $0x8] sm:$0xff] %v171
                $region56: #{precompute_enc_proj.1} parent=50 // loop_footer
                  %s166 = sadd.s32 1, %s162
                $region57: #{precompute_enc_proj.1} parent=50 // loop_footer_branch
                  %161 = sbr.rel target = $region53
                $region58: #{precompute_enc_proj.1} parent=50 // loop_exit
                  _
              $region51: #{precompute_enc_proj.1} parent=35 // pred_fallthru
                _
              // Predicated region
              $region59: #{precompute_enc_proj.1} parent=35 // pred_check
                _
              $region60: #{precompute_enc_proj.1} parent=35 // pred_check_branch
                %174 = sbr.rel target = $region62
              $region61: #{precompute_enc_proj.1} parent=35 // pred_region
                _
              $region62: #{precompute_enc_proj.1} parent=35 // pred_fallthru
                _
            $region36: #{precompute_enc_proj.1} parent=31 // pred_fallthru
              _
            // Predicated region
            $region37: #{precompute_enc_proj.1} parent=31 // pred_check
              _
            $region38: #{precompute_enc_proj.1} parent=31 // pred_check_branch
              %145 = sbr.rel target = $region40
            $region39: #{precompute_enc_proj.1} parent=31 // pred_region
              loop: start=0, step=1, limit=1
              $region41: #{precompute_enc_proj.1} parent=39 // loop_pre_header
                _
              $region42: #{precompute_enc_proj.1} parent=39 // loop_header
                %s148 = sphi 0, %s152
                %p149 = scmp.ge.s32.totalorder %s148, 1
                %s153 = sphi %s139, %s139
                %s154 = sphi %s137, %s137
              $region43: #{precompute_enc_proj.1} parent=39 // loop_header_branch
                %151 = sbr.rel (%p149) target = $region47
              $region44: #{precompute_enc_proj.1} parent=39 // loop_body
                %v155 = vld [vmem:[%s153] sm:$0xff]
                %156 = vst [vmem:[%s154] sm:$0xff] %v155
                %v157 = vld [vmem:[%s153 + $0x10] sm:$0xff]
                %158 = vst [vmem:[%s154 + $0x8] sm:$0xff] %v157
              $region45: #{precompute_enc_proj.1} parent=39 // loop_footer
                %s152 = sadd.s32 1, %s148
              $region46: #{precompute_enc_proj.1} parent=39 // loop_footer_branch
                %147 = sbr.rel target = $region42
              $region47: #{precompute_enc_proj.1} parent=39 // loop_exit
                _
            $region40: #{precompute_enc_proj.1} parent=31 // pred_fallthru
              _
          $region32: #{precompute_enc_proj.1} parent=27 // pred_fallthru
            _
          %175 = vnop
        $region28: #{precompute_enc_proj.1} parent=23 // pred_fallthru
          _
      $region24: #{precompute_enc_proj.1} parent=5 // pred_fallthru
        _
      %p176 = scmp.le.s32.totalorder 1, %s12
      %p177 = scmp.lt.s32.totalorder %s12, 3
      %p178 = pnand %p176, %p177
      %p179 = pneg %p178
      // Predicated region
      $region63: #{precompute_enc_proj.1} parent=5 // pred_check
        _
      $region64: #{precompute_enc_proj.1} parent=5 // pred_check_branch
        %181 = sbr.rel (%p178) target = $region66
      $region65: #{precompute_enc_proj.1} parent=5 // pred_region
        %s182 = ssub.s32 %s12, 1
        %s183 = sand.u32 %s25, 1
        %s184 = sand.u32 %s25, 1
        %s185 = smul.addr %s184, 16
        %s186 = scalar_lea.vmem [#allocation2], %s185
        // Predicated region
        $region67: #{precompute_enc_proj.1} parent=65 // pred_check
          %p187 = pneg %p38
        $region68: #{precompute_enc_proj.1} parent=65 // pred_check_branch
          %189 = sbr.rel (%p187) target = $region70
        $region69: #{precompute_enc_proj.1} parent=65 // pred_region
          _
        $region70: #{precompute_enc_proj.1} parent=65 // pred_fallthru
          _
        %s190 = sand.u32 %s25, 1
        %s191 = sand.u32 %s25, 1
        %s192 = smul.addr %s191, 16
        %s193 = scalar_lea.vmem [#allocation2], %s192
        %p194 = pneg %p38
        %p195 = pneg %p35
        %p196 = pneg %p59
        %p197 = pneg %p56
        %p198 = pneg %p80
        %p199 = pneg %p77
        %p200 = pneg %p106
        %p201 = pneg %p103
        %s202 = sand.u32 %s93, 1
        %s203 = scalar_lea.sflag [#allocation4], %s202
        %s204 = sand.u32 %s93, 1
        %s205 = smul.addr %s204, 16
        %s206 = scalar_lea.vmem [#allocation3], %s205
        %v207 = vld [vmem:[%s186] sm:$0xff]
        %v208 = vld [vmem:[%s1] sm:$0xff]
        %v209 = vld [vmem:[%s1 + $0x8] sm:$0xff]
        %v210 = vld [vmem:[%s1 + $0x10] sm:$0xff]
        %v211 = vld [vmem:[%s1 + $0x18] sm:$0xff]
        %v212 = vld [vmem:[%s2] sm:$0x1]
        %v214 = vlaneseq
        %v215 = vshrl.u32 %v214, 7
        %v216 = vsub.s32 0, %v215
        %v217 = vrot.slane %v212, %v216
        %vm219 = vcmask 261120
        %v221 = vsel %vm219, %v207, 0
        %223 = vmatprep.subr.mxu0 0.0
        %224 = vmatpush1.msra.mxu0 %v208
        %225 = vmatprep.subr.mxu0 0.0
        %226 = vmatpush1.msra.mxu0 %v209
        %227 = vmatprep.subr.mxu0 0.0
        %228 = vmatpush1.msra.mxu0 %v210
        %229 = vmatprep.subr.mxu0 0.0
        %230 = vmatpush1.msra.mxu0 %v211
        %231 = vmatprep.subr.mxu0 0.0
        %232 = vmatpush1.msra.mxu0 0.0
        %233 = vmatprep.subr.mxu0 0.0
        %234 = vmatpush1.msra.mxu0 0.0
        %235 = vmatprep.subr.mxu0 0.0
        %236 = vmatpush1.msra.mxu0 0.0
        %237 = vmatprep.subr.mxu0 0.0
        %238 = vmatpush1.msra.mxu0 0.0
        %239 = vmatprep.subr.mxu0 0.0
        %240 = vmatpush1.msra.mxu0 0.0
        %241 = vmatprep.subr.mxu0 0.0
        %242 = vmatpush1.msra.mxu0 0.0
        %243 = vmatprep.subr.mxu0 0.0
        %244 = vmatpush1.msra.mxu0 0.0
        %245 = vmatprep.subr.mxu0 0.0
        %246 = vmatpush1.msra.mxu0 0.0
        %247 = vmatprep.subr.mxu0 0.0
        %248 = vmatpush1.msra.mxu0 0.0
        %249 = vmatprep.subr.mxu0 0.0
        %250 = vmatpush1.msra.mxu0 0.0
        %251 = vmatprep.subr.mxu0 0.0
        %252 = vmatpush1.msra.mxu0 0.0
        %253 = vmatprep.subr.mxu0 0.0
        %254 = vmatpush1.msra.mxu0 0.0
        %255 = vmatprep.subr.mxu0 0.0
        %256 = vmatpush1.msra.mxu0 0.0
        %257 = vmatprep.subr.mxu0 0.0
        %258 = vmatpush1.msra.mxu0 0.0
        %259 = vmatprep.subr.mxu0 0.0
        %260 = vmatpush1.msra.mxu0 0.0
        %261 = vmatprep.subr.mxu0 0.0
        %262 = vmatpush1.msra.mxu0 0.0
        %263 = vmatprep.subr.mxu0 0.0
        %264 = vmatpush1.msra.mxu0 0.0
        %265 = vmatprep.subr.mxu0 0.0
        %266 = vmatpush1.msra.mxu0 0.0
        %267 = vmatprep.subr.mxu0 0.0
        %268 = vmatpush1.msra.mxu0 0.0
        %269 = vmatprep.subr.mxu0 0.0
        %270 = vmatpush1.msra.mxu0 0.0
        %271 = vmatprep.subr.mxu0 0.0
        %272 = vmatpush1.msra.mxu0 0.0
        %273 = vmatprep.subr.mxu0 0.0
        %274 = vmatpush1.msra.mxu0 0.0
        %275 = vmatprep.subr.mxu0 0.0
        %276 = vmatpush1.msra.mxu0 0.0
        %277 = vmatprep.subr.mxu0 0.0
        %278 = vmatpush1.msra.mxu0 0.0
        %279 = vmatprep.subr.mxu0 0.0
        %280 = vmatpush1.msra.mxu0 0.0
        %281 = vmatprep.subr.mxu0 0.0
        %282 = vmatpush1.msra.mxu0 0.0
        %283 = vmatprep.subr.mxu0 0.0
        %284 = vmatpush1.msra.mxu0 0.0
        %285 = vmatprep.subr.mxu0 0.0
        %286 = vmatpush1.msra.mxu0 0.0
        %287 = vmatprep.mubr.f32.mxu0 0.0
        %288 = vmatmul.mubr.f32.gmra.mrb[0].mxu0 %v221
        %v289 = vpop.f32.mrb[0].mxu0
        %v290 = vadd.f32 %v217, %v289
        %v291 = vpop.f32.mrb[0].mxu0
        %292 = vdwg.mxu0
        %v293 = vtanh.pop %v290
        %vm294 = vcmask 130048
        %295 = vst.msk [vmem:[%s206] sm:$0xff] %vm294, %v293
        %s296 = scalar_lea.vmem %s186, 8 [#allocation2]
        %v297 = vld [vmem:[%s296] sm:$0xff]
        %v298 = vld [vmem:[%s1] sm:$0xff]
        %v299 = vld [vmem:[%s1 + $0x8] sm:$0xff]
        %v300 = vld [vmem:[%s1 + $0x10] sm:$0xff]
        %v301 = vld [vmem:[%s1 + $0x18] sm:$0xff]
        %v302 = vld [vmem:[%s2] sm:$0x1]
        %v304 = vlaneseq
        %v305 = vshrl.u32 %v304, 7
        %v306 = vsub.s32 0, %v305
        %v307 = vrot.slane %v302, %v306
        %v310 = vsel %vm219, %v297, 0
        %312 = vmatprep.subr.mxu0 0.0
        %313 = vmatpush1.msra.mxu0 %v298
        %314 = vmatprep.subr.mxu0 0.0
        %315 = vmatpush1.msra.mxu0 %v299
        %316 = vmatprep.subr.mxu0 0.0
        %317 = vmatpush1.msra.mxu0 %v300
        %318 = vmatprep.subr.mxu0 0.0
        %319 = vmatpush1.msra.mxu0 %v301
        %320 = vmatprep.subr.mxu0 0.0
        %321 = vmatpush1.msra.mxu0 0.0
        %322 = vmatprep.subr.mxu0 0.0
        %323 = vmatpush1.msra.mxu0 0.0
        %324 = vmatprep.subr.mxu0 0.0
        %325 = vmatpush1.msra.mxu0 0.0
        %326 = vmatprep.subr.mxu0 0.0
        %327 = vmatpush1.msra.mxu0 0.0
        %328 = vmatprep.subr.mxu0 0.0
        %329 = vmatpush1.msra.mxu0 0.0
        %330 = vmatprep.subr.mxu0 0.0
        %331 = vmatpush1.msra.mxu0 0.0
        %332 = vmatprep.subr.mxu0 0.0
        %333 = vmatpush1.msra.mxu0 0.0
        %334 = vmatprep.subr.mxu0 0.0
        %335 = vmatpush1.msra.mxu0 0.0
        %336 = vmatprep.subr.mxu0 0.0
        %337 = vmatpush1.msra.mxu0 0.0
        %338 = vmatprep.subr.mxu0 0.0
        %339 = vmatpush1.msra.mxu0 0.0
        %340 = vmatprep.subr.mxu0 0.0
        %341 = vmatpush1.msra.mxu0 0.0
        %342 = vmatprep.subr.mxu0 0.0
        %343 = vmatpush1.msra.mxu0 0.0
        %344 = vmatprep.subr.mxu0 0.0
        %345 = vmatpush1.msra.mxu0 0.0
        %346 = vmatprep.subr.mxu0 0.0
        %347 = vmatpush1.msra.mxu0 0.0
        %348 = vmatprep.subr.mxu0 0.0
        %349 = vmatpush1.msra.mxu0 0.0
        %350 = vmatprep.subr.mxu0 0.0
        %351 = vmatpush1.msra.mxu0 0.0
        %352 = vmatprep.subr.mxu0 0.0
        %353 = vmatpush1.msra.mxu0 0.0
        %354 = vmatprep.subr.mxu0 0.0
        %355 = vmatpush1.msra.mxu0 0.0
        %356 = vmatprep.subr.mxu0 0.0
        %357 = vmatpush1.msra.mxu0 0.0
        %358 = vmatprep.subr.mxu0 0.0
        %359 = vmatpush1.msra.mxu0 0.0
        %360 = vmatprep.subr.mxu0 0.0
        %361 = vmatpush1.msra.mxu0 0.0
        %362 = vmatprep.subr.mxu0 0.0
        %363 = vmatpush1.msra.mxu0 0.0
        %364 = vmatprep.subr.mxu0 0.0
        %365 = vmatpush1.msra.mxu0 0.0
        %366 = vmatprep.subr.mxu0 0.0
        %367 = vmatpush1.msra.mxu0 0.0
        %368 = vmatprep.subr.mxu0 0.0
        %369 = vmatpush1.msra.mxu0 0.0
        %370 = vmatprep.subr.mxu0 0.0
        %371 = vmatpush1.msra.mxu0 0.0
        %372 = vmatprep.subr.mxu0 0.0
        %373 = vmatpush1.msra.mxu0 0.0
        %374 = vmatprep.subr.mxu0 0.0
        %375 = vmatpush1.msra.mxu0 0.0
        %376 = vmatprep.mubr.f32.mxu0 0.0
        %377 = vmatmul.mubr.f32.gmra.mrb[0].mxu0 %v310
        %v378 = vpop.f32.mrb[0].mxu0
        %v379 = vadd.f32 %v307, %v378
        %v380 = vpop.f32.mrb[0].mxu0
        %381 = vdwg.mxu0
        %v382 = vtanh.pop %v379
        %s383 = scalar_lea.vmem %s206, 8 [#allocation3]
        %384 = vst.msk [vmem:[%s383] sm:$0xff] %vm294, %v382
        %s385 = sand.u32 %s93, 1
        %s386 = scalar_lea.sflag [#allocation4], %s385
        %s387 = sand.u32 %s93, 1
        %s388 = smul.addr %s387, 16
        %s389 = scalar_lea.vmem [#allocation3], %s388
        // Predicated region
        $region71: #{precompute_enc_proj.1} parent=65 // pred_check
          %p390 = pneg %p103
        $region72: #{precompute_enc_proj.1} parent=65 // pred_check_branch
          %392 = sbr.rel (%p390) target = $region74
        $region73: #{precompute_enc_proj.1} parent=65 // pred_region
          %s394 = ssub.s32 256, 256
          %395 = vsyncadd %s386, %s394
          %s396 = smul.addr %s17, 128
          %s397 = scalar_lea.hbm %s3, %s396
          %s398 = sshll.u32 %s389, 4
          %s399 = int_to_ptr.vmem [resolvable:$true] %s398
          %404 = dma.vmem_to_hbm [thread:$0]  %s399, 256, %s397, %s386, 128, 256, 8
        $region74: #{precompute_enc_proj.1} parent=65 // pred_fallthru
          _
      $region66: #{precompute_enc_proj.1} parent=5 // pred_fallthru
        _
      %p405 = scmp.le.s32.totalorder 2, %s12
      // Predicated region
      $region75: #{precompute_enc_proj.1} parent=5 // pred_check
        %p406 = pneg %p405
      $region76: #{precompute_enc_proj.1} parent=5 // pred_check_branch
        %408 = sbr.rel (%p406) target = $region78
      $region77: #{precompute_enc_proj.1} parent=5 // pred_region
        %s409 = ssub.s32 %s12, 2
        // Predicated region
        $region79: #{precompute_enc_proj.1} parent=77 // pred_check
          %p410 = pneg %p109
        $region80: #{precompute_enc_proj.1} parent=77 // pred_check_branch
          %412 = sbr.rel (%p410) target = $region82
        $region81: #{precompute_enc_proj.1} parent=77 // pred_region
          %s413 = sand.u32 %s94, 1
          %s414 = scalar_lea.sflag [#allocation4], %s413
          %s415 = sand.u32 %s94, 1
          %s416 = smul.addr %s415, 16
          %s417 = scalar_lea.vmem [#allocation3], %s416
          %418 = dma.done %s414, 256
        $region82: #{precompute_enc_proj.1} parent=77 // pred_fallthru
          _
      $region78: #{precompute_enc_proj.1} parent=5 // pred_fallthru
        _
    $region6: #{precompute_enc_proj.1} parent=1 // loop_footer
      %s16 = sadd.s32 1, %s12
    $region7: #{precompute_enc_proj.1} parent=1 // loop_footer_branch
      %11 = sbr.rel target = $region3
    $region8: #{precompute_enc_proj.1} parent=1 // loop_exit
      _
    %419 = vsyncpa [#allocation4], 1
    %s420 = scalar_lea.sflag [#allocation4], 1
    %421 = vsyncpa %s420, 1

</llo_original>
